<compile_context>
chip_gen: v6e
topology: v6e:2x2x1
jax: 0.10.0
libtpu: 0.0.40
codegen_flags: <defaults>
</compile_context>

<pallas_src>
import functools
import numpy as np
import jax
import jax.numpy as jnp
from jax.experimental import pallas as pl
from jax.experimental.pallas import tpu as pltpu


# ------------------------------ PPower variants -------------------------------
_TINY = 1e-30


def _ppow_nonneg(x, lam):
    """PPower for x >= 0 (power spectrum): x>0 -> x**lam, x==0 -> 0."""
    if lam == 1.0:
        return x
    if lam == 2.0:
        return x * x
    if lam == 0.5:
        return jnp.sqrt(x)                                   # single EUP op
    return jnp.where(x > 0.0,
                     jnp.exp(lam * jnp.log(jnp.maximum(x, _TINY))),
                     0.0)


def _ppow_signed(x, lam):
    """PPower for signed x (cos-transform outputs): x>0 -> x**lam, x<=0 -> 0."""
    if lam == 1.0:
        return jnp.maximum(x, 0.0)
    if lam == 2.0:
        xp = jnp.maximum(x, 0.0)
        return xp * xp
    if lam == 0.5:
        return jnp.sqrt(jnp.maximum(x, 0.0))
    m = x > 0.0
    safe = jnp.where(m, x, 1.0)                              # strictly positive
    return jnp.where(m, jnp.exp(lam * jnp.log(safe)), 0.0)


# --------------------------- fused MLC kernel --------------------------------
def _make_mlc_kernel(gammas, n):
    """Build the fused kernel for a fixed (static) gamma chain."""
    g0 = float(gammas[0])
    layer_gs = tuple(float(v) for v in gammas[1:])

    def kernel(frames_ref, stft_ref, mcos_ref, ceps_ref, spec_ref):
        # STFT power spectrum: one (tm, N) x (N, 2N) bf16 MXU matmul with the
        # Hann window folded into stft_ref, f32 accumulate, then |.|^2 from the
        # real/imag halves.  PPower math stays f32.
        z = jnp.dot(frames_ref[...].astype(jnp.bfloat16), stft_ref[...],
                    preferred_element_type=jnp.float32)
        xr = z[:, :n]
        xi = z[:, n:]
        spec = _ppow_nonneg(xr * xr + xi * xi, g0)
        ceps = jnp.zeros_like(spec)

        # Static unrolled layer chain (gammas baked in); band masks are folded
        # into the two cos matrices (index 0: low-pass band, 1: high-pass band).
        for d, lam in enumerate(layer_gs):
            cm = mcos_ref[d % 2]                             # static -> (N, N) bf16
            src = ceps if (d % 2) else spec
            y = jnp.dot(src.astype(jnp.bfloat16), cm,
                        preferred_element_type=jnp.float32)
            out = _ppow_signed(y, lam)
            if d % 2:
                spec = out
            else:
                ceps = out

        ceps_ref[...] = ceps
        spec_ref[...] = spec

    return kernel


# ----------------------------- tiling / budget --------------------------------
def _round_up(v, m):
    return -(-v // m) * m


def _choose_tm(rows, tm_max=512):
    """Largest row tile that fits; never force a multi-step grid for tiny inputs."""
    rows8 = max(8, _round_up(rows, 8))
    if rows8 <= tm_max:
        return rows8                                         # single grid step
    steps = -(-rows // tm_max)                               # balance the tail
    return _round_up(-(-rows // steps), 8)


def _vmem_budget_bytes(tm, n, weight_bytes):
    act = tm * n * 4                                         # one f32 (tm, N) tile
    # frames (2 bufs) + 2 outputs (2 bufs each) + ~12 live f32 intermediates
    # (z is two tiles wide) + double-buffered bf16 weights + slack.
    budget = 2 * act + 4 * act + 12 * act + 2 * weight_bytes + (4 << 20)
    return int(min(budget, 64 << 20))


def mlc_fused(frames2d, stft_mat, mcos, gammas, tm=None):
    rows, n = frames2d.shape
    n_layers = len(gammas) - 1
    if tm is None:
        tm = _choose_tm(rows)
    grid = pl.cdiv(rows, tm)
    padded = grid * tm
    if padded != rows:         # zero-pad tail tile (zeros stay exactly 0 through PPower)
        frames2d = jnp.pad(frames2d, ((0, padded - rows), (0, 0)))

    weight_bytes = (stft_mat.size * stft_mat.dtype.itemsize
                    + mcos.size * mcos.dtype.itemsize)
    cost = pl.CostEstimate(
        flops=int(padded * 2 * n * n * (2 + n_layers)),
        transcendentals=int(padded * n * 2 * (n_layers + 1)),
        bytes_accessed=int(padded * n * 4 * 3 + weight_bytes),
    )

    kernel = _make_mlc_kernel(gammas, n)
    ceps, spec = pl.pallas_call(
        kernel,
        out_shape=(jax.ShapeDtypeStruct((padded, n), jnp.float32),
                   jax.ShapeDtypeStruct((padded, n), jnp.float32)),
        grid_spec=pltpu.PrefetchScalarGridSpec(
            num_scalar_prefetch=0,
            grid=(grid,),
            in_specs=[
                pl.BlockSpec((tm, n), lambda i: (i, 0)),          # frames (f32)
                # Grid-invariant bf16 weights (halved DMA/VMEM vs f32).  At
                # N=128 the double-buffered copies are ~256 KiB total; for
                # large N, single-buffer them (pipeline_mode=pl.Buffered(1)).
                pl.BlockSpec((n, 2 * n), lambda i: (0, 0)),       # windowed cos|sin
                pl.BlockSpec((2, n, n), lambda i: (0, 0, 0)),     # masked cos (lp, hp)
            ],
            out_specs=(pl.BlockSpec((tm, n), lambda i: (i, 0)),
                       pl.BlockSpec((tm, n), lambda i: (i, 0))),
        ),
        compiler_params=pltpu.CompilerParams(
            dimension_semantics=("parallel",),
            vmem_limit_bytes=_vmem_budget_bytes(tm, n, weight_bytes)),
        cost_estimate=cost,
    )(frames2d, stft_mat, mcos)
    return ceps[:rows], spec[:rows]


# --------------------------- host-side constants ------------------------------
def _mlc_constants(N, sr, hipass_f, lowpass_t):
    hpi = int(hipass_f * N / sr) + 1
    lpi = int(lowpass_t * sr / 1000) + 1

    nn_ = np.arange(N, dtype=np.float64)
    # torch.hann_window(N) (periodic): 0.5*(1 - cos(2*pi*n/N))
    window = 0.5 * (1.0 - np.cos(2.0 * np.pi * nn_ / N))
    ang = 2.0 * np.pi * np.outer(nn_, nn_) / N
    cos = np.cos(ang) / np.sqrt(N)        # normalized full DFT (real part)
    sin = -np.sin(ang) / np.sqrt(N)       # normalized full DFT (imag part)

    # Hann window folded in: (x*w) @ C == x @ (diag(w) C).  cos|sin concatenated.
    stft_mat = np.concatenate([window[:, None] * cos,
                               window[:, None] * sin], axis=1)

    def col_mask(idx):
        m = np.ones((N,), np.float64)
        m[:idx] = 0.0
        m[N - idx:] = 0.0
        return m

    # Band masks folded into cos columns (index 0: lpi layers, 1: hpi layers).
    mcos = np.stack([cos * col_mask(lpi)[None, :],
                     cos * col_mask(hpi)[None, :]], axis=0)

    # bf16 weights: the MXU's peak dtype on v5e/v6e/v7x.
    return (jnp.asarray(stft_mat, jnp.bfloat16),
            jnp.asarray(mcos, jnp.bfloat16))


# ------------------------------- MLC forward ----------------------------------
@functools.partial(jax.jit,
                   static_argnames=("window_size", "hop_size", "sr", "g",
                                    "hipass_f", "lowpass_t"))
def mlc_forward(x, *, window_size, hop_size, sr, g,
                hipass_f=27.5, lowpass_t=0.24):
    B, T = x.shape
    N = window_size
    n_frames = 1 + (T - N) // hop_size

    stft_mat, mcos = _mlc_constants(N, sr, hipass_f, lowpass_t)

    # Framing (torch.stft with center=False) via an XLA gather; it fuses under
    # jit.  In-kernel framing via element-offset index_map / manual DMA would
    # remove this HBM round-trip for large inputs (not needed at these sizes).
    fidx = np.arange(n_frames)[:, None] * hop_size + np.arange(N)[None, :]
    frames = x[:, fidx].reshape(B * n_frames, N)

    ceps, spec = mlc_fused(frames, stft_mat, mcos,
                           tuple(float(v) for v in g))
    return ceps.reshape(B, n_frames, N), spec.reshape(B, n_frames, N)


# ------------------------------ numpy reference --------------------------------
def _mlc_reference(x, N, hop, sr, g, hipass_f=27.5, lowpass_t=0.24):
    B, T = x.shape
    n_frames = 1 + (T - N) // hop
    hpi = int(hipass_f * N / sr) + 1
    lpi = int(lowpass_t * sr / 1000) + 1
    n = np.arange(N)
    w = 0.5 * (1.0 - np.cos(2.0 * np.pi * n / N))
    ang = 2.0 * np.pi * np.outer(n, n) / N
    C = np.cos(ang) / np.sqrt(N)
    S = -np.sin(ang) / np.sqrt(N)

    def ppow(v, lam):
        m = (v > 0).astype(np.float64)
        inv = 1.0 - m
        return np.power(v * m + inv, lam) - inv

    fidx = np.arange(n_frames)[:, None] * hop + n[None, :]
    frames = x[:, fidx].reshape(B * n_frames, N) * w[None, :]
    xr = frames @ C
    xi = frames @ S
    spec = ppow(xr * xr + xi * xi, g[0])
    ceps = np.zeros_like(spec)
    for d, gamma in enumerate(g[1:]):
        idx = hpi if d % 2 else lpi
        y = (ceps if d % 2 else spec) @ C
        y[:, :idx] = 0.0
        y[:, N - idx:] = 0.0
        out = ppow(y, gamma)
        if d % 2:
            spec = out
        else:
            ceps = out
    return ceps.reshape(B, n_frames, N), spec.reshape(B, n_frames, N)


if __name__ == "__main__":
    # window_size (in_channels) = 128 (lane-aligned), hop = 64, 8 frames, batch 2.
    B = 2
    N = 128          # in_channels / window_size / #freq bins
    sr = 16000
    hop = 64
    n_frames = 8
    T = N + (n_frames - 1) * hop          # 576 samples
    g = (0.5, 0.6, 0.7, 0.8)              # g0 + 3 gamma_layers (static, hashable)

    key = jax.random.PRNGKey(0)
    x = jax.random.normal(key, (B, T), dtype=jnp.float32)

    ceps, spec = mlc_forward(x, window_size=N, hop_size=hop, sr=sr, g=g)
    jax.block_until_ready((ceps, spec))

    assert ceps.shape == (B, n_frames, N) and spec.shape == (B, n_frames, N)
    assert bool(jnp.all(jnp.isfinite(ceps))) and bool(jnp.all(jnp.isfinite(spec)))

    # Correctness vs. float64 numpy reference of the same math (bf16 MXU
    # operands with f32 accumulation stay well inside this tolerance at K=128).
    ceps_ref, spec_ref = _mlc_reference(np.asarray(x, np.float64), N, hop, sr, g)
    np.testing.assert_allclose(np.asarray(ceps), ceps_ref, rtol=5e-2, atol=5e-2)
    np.testing.assert_allclose(np.asarray(spec), spec_ref, rtol=5e-2, atol=5e-2)

    print("KERNEL_OK")
</pallas_src>

<mosaic_0001>
module attributes {stable_mosaic.version = 11 : i64} {
  func.func @kernel(%arg0: i32, %arg1: memref<16x128xf32, #tpu.memory_space<vmem>>, %arg2: memref<128x256xbf16, #tpu.memory_space<vmem>>, %arg3: memref<2x128x128xbf16, #tpu.memory_space<vmem>>, %arg4: memref<16x128xf32, #tpu.memory_space<vmem>>, %arg5: memref<16x128xf32, #tpu.memory_space<vmem>>) attributes {dimension_semantics = [#tpu.dimension_semantics<parallel>], iteration_bounds = array<i64: 1>, scalar_prefetch = 0 : i64, scratch_operands = 0 : i64, tpu.core_type = #tpu.core_type<tc>, window_params = [{transform_indices = @transform_0, window_bounds = array<i64: 16, 128>}, {pipeline_mode = #tpu.pipeline_mode<synchronous>, transform_indices = @transform_1, window_bounds = array<i64: 128, 256>}, {pipeline_mode = #tpu.pipeline_mode<synchronous>, transform_indices = @transform_2, window_bounds = array<i64: 2, 128, 128>}, {transform_indices = @transform_3, window_bounds = array<i64: 16, 128>}, {transform_indices = @transform_4, window_bounds = array<i64: 16, 128>}]} {
    %c0 = arith.constant 0 : index
    %c0_0 = arith.constant 0 : index
    %0 = vector.load %arg1[%c0, %c0_0] : memref<16x128xf32, #tpu.memory_space<vmem>>, vector<16x128xf32>
    %1 = arith.truncf %0 : vector<16x128xf32> to vector<16x128xbf16>
    %c0_1 = arith.constant 0 : index
    %c0_2 = arith.constant 0 : index
    %2 = vector.load %arg2[%c0_1, %c0_2] : memref<128x256xbf16, #tpu.memory_space<vmem>>, vector<128x256xbf16>
    %cst = arith.constant dense<0.000000e+00> : vector<16x256xf32>
    %3 = tpu.matmul %1, %2, %cst {dimension_numbers = #tpu.dot_dimension_numbers<[1], [0], [0], [1], [0, 0, 1, 1], [], []>} : vector<16x128xbf16>, vector<128x256xbf16>, vector<16x256xf32> -> vector<16x256xf32>
    %4 = vector.extract_strided_slice %3 {offsets = [0, 0], sizes = [16, 128], strides = [1, 1]} : vector<16x256xf32> to vector<16x128xf32>
    %5 = vector.extract_strided_slice %3 {offsets = [0, 128], sizes = [16, 128], strides = [1, 1]} : vector<16x256xf32> to vector<16x128xf32>
    %6 = arith.mulf %4, %4 : vector<16x128xf32>
    %7 = arith.mulf %5, %5 : vector<16x128xf32>
    %8 = arith.addf %6, %7 : vector<16x128xf32>
    %9 = math.sqrt %8 : vector<16x128xf32>
    %c0_3 = arith.constant 0 : index
    %c0_4 = arith.constant 0 : index
    %c0_5 = arith.constant 0 : index
    %10 = vector.load %arg3[%c0_3, %c0_4, %c0_5] : memref<2x128x128xbf16, #tpu.memory_space<vmem>>, vector<1x128x128xbf16>
    %11 = vector.shape_cast %10 : vector<1x128x128xbf16> to vector<128x128xbf16>
    %12 = arith.truncf %9 : vector<16x128xf32> to vector<16x128xbf16>
    %cst_6 = arith.constant dense<0.000000e+00> : vector<16x128xf32>
    %13 = tpu.matmul %12, %11, %cst_6 {dimension_numbers = #tpu.dot_dimension_numbers<[1], [0], [0], [1], [0, 0, 1, 1], [], []>} : vector<16x128xbf16>, vector<128x128xbf16>, vector<16x128xf32> -> vector<16x128xf32>
    %cst_7 = arith.constant 0.000000e+00 : f32
    %14 = vector.broadcast %cst_7 : f32 to vector<16x128xf32>
    %15 = arith.cmpf ogt, %13, %14 : vector<16x128xf32>
    %cst_8 = arith.constant 1.000000e+00 : f32
    %16 = vector.broadcast %cst_8 : f32 to vector<16x128xf32>
    %17 = arith.select %15, %13, %16 : vector<16x128xi1>, vector<16x128xf32>
    %18 = math.log %17 : vector<16x128xf32>
    %cst_9 = arith.constant 6.000000e-01 : f32
    %19 = vector.broadcast %cst_9 : f32 to vector<16x128xf32>
    %20 = arith.mulf %19, %18 : vector<16x128xf32>
    %21 = math.exp %20 : vector<16x128xf32>
    %cst_10 = arith.constant 0.000000e+00 : f32
    %22 = vector.broadcast %cst_10 : f32 to vector<16x128xf32>
    %23 = arith.select %15, %21, %22 : vector<16x128xi1>, vector<16x128xf32>
    %c1 = arith.constant 1 : index
    %c0_11 = arith.constant 0 : index
    %c0_12 = arith.constant 0 : index
    %24 = vector.load %arg3[%c1, %c0_11, %c0_12] : memref<2x128x128xbf16, #tpu.memory_space<vmem>>, vector<1x128x128xbf16>
    %25 = vector.shape_cast %24 : vector<1x128x128xbf16> to vector<128x128xbf16>
    %26 = arith.truncf %23 : vector<16x128xf32> to vector<16x128xbf16>
    %cst_13 = arith.constant dense<0.000000e+00> : vector<16x128xf32>
    %27 = tpu.matmul %26, %25, %cst_13 {dimension_numbers = #tpu.dot_dimension_numbers<[1], [0], [0], [1], [0, 0, 1, 1], [], []>} : vector<16x128xbf16>, vector<128x128xbf16>, vector<16x128xf32> -> vector<16x128xf32>
    %cst_14 = arith.constant 0.000000e+00 : f32
    %28 = vector.broadcast %cst_14 : f32 to vector<16x128xf32>
    %29 = arith.cmpf ogt, %27, %28 : vector<16x128xf32>
    %cst_15 = arith.constant 1.000000e+00 : f32
    %30 = vector.broadcast %cst_15 : f32 to vector<16x128xf32>
    %31 = arith.select %29, %27, %30 : vector<16x128xi1>, vector<16x128xf32>
    %32 = math.log %31 : vector<16x128xf32>
    %cst_16 = arith.constant 0.699999988 : f32
    %33 = vector.broadcast %cst_16 : f32 to vector<16x128xf32>
    %34 = arith.mulf %33, %32 : vector<16x128xf32>
    %35 = math.exp %34 : vector<16x128xf32>
    %cst_17 = arith.constant 0.000000e+00 : f32
    %36 = vector.broadcast %cst_17 : f32 to vector<16x128xf32>
    %37 = arith.select %29, %35, %36 : vector<16x128xi1>, vector<16x128xf32>
    %c0_18 = arith.constant 0 : index
    %c0_19 = arith.constant 0 : index
    %c0_20 = arith.constant 0 : index
    %38 = vector.load %arg3[%c0_18, %c0_19, %c0_20] : memref<2x128x128xbf16, #tpu.memory_space<vmem>>, vector<1x128x128xbf16>
    %39 = vector.shape_cast %38 : vector<1x128x128xbf16> to vector<128x128xbf16>
    %40 = arith.truncf %37 : vector<16x128xf32> to vector<16x128xbf16>
    %cst_21 = arith.constant dense<0.000000e+00> : vector<16x128xf32>
    %41 = tpu.matmul %40, %39, %cst_21 {dimension_numbers = #tpu.dot_dimension_numbers<[1], [0], [0], [1], [0, 0, 1, 1], [], []>} : vector<16x128xbf16>, vector<128x128xbf16>, vector<16x128xf32> -> vector<16x128xf32>
    %cst_22 = arith.constant 0.000000e+00 : f32
    %42 = vector.broadcast %cst_22 : f32 to vector<16x128xf32>
    %43 = arith.cmpf ogt, %41, %42 : vector<16x128xf32>
    %cst_23 = arith.constant 1.000000e+00 : f32
    %44 = vector.broadcast %cst_23 : f32 to vector<16x128xf32>
    %45 = arith.select %43, %41, %44 : vector<16x128xi1>, vector<16x128xf32>
    %46 = math.log %45 : vector<16x128xf32>
    %cst_24 = arith.constant 8.000000e-01 : f32
    %47 = vector.broadcast %cst_24 : f32 to vector<16x128xf32>
    %48 = arith.mulf %47, %46 : vector<16x128xf32>
    %49 = math.exp %48 : vector<16x128xf32>
    %cst_25 = arith.constant 0.000000e+00 : f32
    %50 = vector.broadcast %cst_25 : f32 to vector<16x128xf32>
    %51 = arith.select %43, %49, %50 : vector<16x128xi1>, vector<16x128xf32>
    %c0_26 = arith.constant 0 : index
    %c0_27 = arith.constant 0 : index
    %52 = vector.load %arg4[%c0_26, %c0_27] : memref<16x128xf32, #tpu.memory_space<vmem>>, vector<16x128xf32>
    tpu.vector_store %arg4[%c0_26, %c0_27], %51 {strides = array<i32>} : memref<16x128xf32, #tpu.memory_space<vmem>>, vector<16x128xf32>,
    %c0_28 = arith.constant 0 : index
    %c0_29 = arith.constant 0 : index
    %53 = vector.load %arg5[%c0_28, %c0_29] : memref<16x128xf32, #tpu.memory_space<vmem>>, vector<16x128xf32>
    tpu.vector_store %arg5[%c0_28, %c0_29], %37 {strides = array<i32>} : memref<16x128xf32, #tpu.memory_space<vmem>>, vector<16x128xf32>,
    return
  }
  func.func @transform_0(%arg0: i32) -> (i32, i32) {
    %c0_i32 = arith.constant 0 : i32
    %c0_i32_0 = arith.constant 0 : i32
    return %arg0, %c0_i32 : i32, i32
  }
  func.func @transform_1(%arg0: i32) -> (i32, i32) {
    %c0_i32 = arith.constant 0 : i32
    %c0_i32_0 = arith.constant 0 : i32
    %c0_i32_1 = arith.constant 0 : i32
    return %c0_i32, %c0_i32_0 : i32, i32
  }
  func.func @transform_2(%arg0: i32) -> (i32, i32, i32) {
    %c0_i32 = arith.constant 0 : i32
    %c0_i32_0 = arith.constant 0 : i32
    %c0_i32_1 = arith.constant 0 : i32
    %c0_i32_2 = arith.constant 0 : i32
    return %c0_i32, %c0_i32_0, %c0_i32_1 : i32, i32, i32
  }
  func.func @transform_3(%arg0: i32) -> (i32, i32) {
    %c0_i32 = arith.constant 0 : i32
    %c0_i32_0 = arith.constant 0 : i32
    return %arg0, %c0_i32 : i32, i32
  }
  func.func @transform_4(%arg0: i32) -> (i32, i32) {
    %c0_i32 = arith.constant 0 : i32
    %c0_i32_0 = arith.constant 0 : i32
    return %arg0, %c0_i32 : i32, i32
  }
}

</mosaic_0001>

<llo_original>
// kernel: mlc_forward.1
$region0: #{mlc_forward.1}
  #allocation0 [shape = 'u32[]', space=smem, size = 0x4, offset = 0x4, fixed_abs, tag = 'smem constant byte address 0x4 - core index']
  #allocation1 [shape = 'u32[144,128]{1,0:T(1,128)}', space=vmem, size = 0x12000, scoped, tag = 'internal scratch']
  %s0 = inlined_call_operand.vmem [shape: f32[16,128], index: 0, kind: input, shape index: {}]
  %s1 = inlined_call_operand.vmem [shape: bf16[128,256], index: 1, kind: input, shape index: {}]
  %s2 = inlined_call_operand.vmem [shape: bf16[2,128,128], index: 2, kind: input, shape index: {}]
  %s3 = inlined_call_operand.hbm [shape: f32[16,128], index: 3, kind: output, shape index: {0}]
  %s4 = inlined_call_operand.hbm [shape: f32[16,128], index: 4, kind: output, shape index: {1}]
  %5 = xla_tuple %s3, %s4
  %s6 = sld [smem:[#allocation0]]
  $region30: #{mlc_forward.1} parent=0
    _
  %s8 = ssub.s32 1, %s6
  %s9 = scalar_select 0, %s8, %s6
  $region1: #{mlc_forward.1} parent=0
    #allocation2 [shape = 'u8[8192]{0}', space=vmem, size = 0x2000, scoped, tag = 'output window, operand 0, single buffered']
    #allocation3 [shape = 's32[1]{0}', space=sflag, size = 0x4, scoped, tag = 'scoped memory for mlc_forward.1']
    #allocation4 [shape = 'u8[8192]{0}', space=vmem, size = 0x2000, scoped, tag = 'output window, operand 1, single buffered']
    #allocation5 [shape = 's32[1]{0}', space=sflag, size = 0x4, scoped, tag = 'scoped memory for mlc_forward.1']
    %10 = vsyncpa [#allocation3], 0
    %11 = vsyncpa [#allocation5], 0
    // Predicated region
    $region2: #{mlc_forward.1} parent=1 // pred_check
      _
    $region3: #{mlc_forward.1} parent=1 // pred_check_branch
      %13 = sbr.rel (0) target = $region5
    $region4: #{mlc_forward.1} parent=1 // pred_region
      _
    $region5: #{mlc_forward.1} parent=1 // pred_fallthru
      _
    // Predicated region
    $region6: #{mlc_forward.1} parent=1 // pred_check
      _
    $region7: #{mlc_forward.1} parent=1 // pred_check_branch
      %15 = sbr.rel (0) target = $region9
    $region8: #{mlc_forward.1} parent=1 // pred_region
      _
    $region9: #{mlc_forward.1} parent=1 // pred_fallthru
      _
    // Predicated region
    $region10: #{mlc_forward.1} parent=1 // pred_check
      _
    $region11: #{mlc_forward.1} parent=1 // pred_check_branch
      %17 = sbr.rel (0) target = $region13
    $region12: #{mlc_forward.1} parent=1 // pred_region
      _
    $region13: #{mlc_forward.1} parent=1 // pred_fallthru
      _
    %v19 = vld [vmem:[%s0] sm:$0xff]
    %v20 = vld [vmem:[%s0 + $0x8] sm:$0xff]
    %v21 = vpack.c.bf16 %v20, %v19
    %v22 = vld [vmem:[%s1] sm:$0xff]
    %v23 = vld [vmem:[%s1 + $0x8] sm:$0xff]
    %v24 = vld [vmem:[%s1 + $0x10] sm:$0xff]
    %v25 = vld [vmem:[%s1 + $0x18] sm:$0xff]
    %v26 = vld [vmem:[%s1 + $0x20] sm:$0xff]
    %v27 = vld [vmem:[%s1 + $0x28] sm:$0xff]
    %v28 = vld [vmem:[%s1 + $0x30] sm:$0xff]
    %v29 = vld [vmem:[%s1 + $0x38] sm:$0xff]
    %v30 = vld [vmem:[%s1 + $0x40] sm:$0xff]
    %v31 = vld [vmem:[%s1 + $0x48] sm:$0xff]
    %v32 = vld [vmem:[%s1 + $0x50] sm:$0xff]
    %v33 = vld [vmem:[%s1 + $0x58] sm:$0xff]
    %v34 = vld [vmem:[%s1 + $0x60] sm:$0xff]
    %v35 = vld [vmem:[%s1 + $0x68] sm:$0xff]
    %v36 = vld [vmem:[%s1 + $0x70] sm:$0xff]
    %v37 = vld [vmem:[%s1 + $0x78] sm:$0xff]
    %v54 = vunpack.c.l.b16 %v22
    %v55 = vunpack.c.h.b16 %v22
    %v56 = vunpack.c.l.b16 %v23
    %v57 = vunpack.c.h.b16 %v23
    %v58 = vunpack.c.l.b16 %v24
    %v59 = vunpack.c.h.b16 %v24
    %v60 = vunpack.c.l.b16 %v25
    %v61 = vunpack.c.h.b16 %v25
    %v62 = vunpack.c.l.b16 %v26
    %v63 = vunpack.c.h.b16 %v26
    %v64 = vunpack.c.l.b16 %v27
    %v65 = vunpack.c.h.b16 %v27
    %v66 = vunpack.c.l.b16 %v28
    %v67 = vunpack.c.h.b16 %v28
    %v68 = vunpack.c.l.b16 %v29
    %v69 = vunpack.c.h.b16 %v29
    %v70 = vunpack.c.l.b16 %v30
    %v71 = vunpack.c.h.b16 %v30
    %v72 = vunpack.c.l.b16 %v31
    %v73 = vunpack.c.h.b16 %v31
    %v74 = vunpack.c.l.b16 %v32
    %v75 = vunpack.c.h.b16 %v32
    %v76 = vunpack.c.l.b16 %v33
    %v77 = vunpack.c.h.b16 %v33
    %v78 = vunpack.c.l.b16 %v34
    %v79 = vunpack.c.h.b16 %v34
    %v80 = vunpack.c.l.b16 %v35
    %v81 = vunpack.c.h.b16 %v35
    %v82 = vunpack.c.l.b16 %v36
    %v83 = vunpack.c.h.b16 %v36
    %v84 = vunpack.c.l.b16 %v37
    %v85 = vunpack.c.h.b16 %v37
    %v86 = vpack.c.b16 %v56, %v54
    %v87 = vpack.c.b16 %v57, %v55
    %v88 = vpack.c.b16 %v60, %v58
    %v89 = vpack.c.b16 %v61, %v59
    %v90 = vpack.c.b16 %v64, %v62
    %v91 = vpack.c.b16 %v65, %v63
    %v92 = vpack.c.b16 %v68, %v66
    %v93 = vpack.c.b16 %v69, %v67
    %v94 = vpack.c.b16 %v72, %v70
    %v95 = vpack.c.b16 %v73, %v71
    %v96 = vpack.c.b16 %v76, %v74
    %v97 = vpack.c.b16 %v77, %v75
    %v98 = vpack.c.b16 %v80, %v78
    %v99 = vpack.c.b16 %v81, %v79
    %v100 = vpack.c.b16 %v84, %v82
    %v101 = vpack.c.b16 %v85, %v83
    %118 = vmatprep.subr.bf16.mxu0 %v101
    %119 = vmatpush1.bf16.msra.mxu0 %v100
    %120 = vmatprep.subr.bf16.mxu0 %v99
    %121 = vmatpush1.bf16.msra.mxu0 %v98
    %122 = vmatprep.subr.bf16.mxu0 %v97
    %123 = vmatpush1.bf16.msra.mxu0 %v96
    %124 = vmatprep.subr.bf16.mxu0 %v95
    %125 = vmatpush1.bf16.msra.mxu0 %v94
    %126 = vmatprep.subr.bf16.mxu0 %v93
    %127 = vmatpush1.bf16.msra.mxu0 %v92
    %128 = vmatprep.subr.bf16.mxu0 %v91
    %129 = vmatpush1.bf16.msra.mxu0 %v90
    %130 = vmatprep.subr.bf16.mxu0 %v89
    %131 = vmatpush1.bf16.msra.mxu0 %v88
    %132 = vmatprep.subr.bf16.mxu0 %v87
    %133 = vmatpush1.bf16.msra.mxu0 %v86
    %134 = vmatprep.subr.bf16.mxu0 0
    %135 = vmatpush2.bf16.msra.mxu0 0
    %136 = vmatprep.subr.bf16.mxu0 0
    %137 = vmatpush2.bf16.msra.mxu0 0
    %138 = vmatprep.subr.bf16.mxu0 0
    %139 = vmatpush2.bf16.msra.mxu0 0
    %140 = vmatprep.subr.bf16.mxu0 0
    %141 = vmatpush2.bf16.msra.mxu0 0
    %142 = vmatprep.subr.bf16.mxu0 0
    %143 = vmatpush2.bf16.msra.mxu0 0
    %144 = vmatprep.subr.bf16.mxu0 0
    %145 = vmatpush2.bf16.msra.mxu0 0
    %146 = vmatprep.subr.bf16.mxu0 0
    %147 = vmatpush2.bf16.msra.mxu0 0
    %148 = vmatprep.subr.bf16.mxu0 0
    %149 = vmatpush2.bf16.msra.mxu0 0
    %150 = vmatprep.mubr.bf16.mxu0 0
    %151 = vmatmul.mubr.bf16.gmra.mxu0 %v21
    %v152 = vpop.f32.mrf.mxu0
    %v153 = vadd.f32 0.0, %v152
    %v154 = vpop.f32.mrf.mxu0
    %v155 = vadd.f32 0.0, %v154
    %v156 = vpop.f32.mrf.mxu0
    %v157 = vadd.f32 0.0, %v156
    %v158 = vpop.f32.mrf.mxu0
    %v159 = vadd.f32 0.0, %v158
    %160 = vdwg.mxu0
    %v161 = vmul.f32 %v153, %v153
    %v162 = vmul.f32 %v157, %v157
    %v163 = vmul.f32 %v155, %v155
    %v164 = vmul.f32 %v159, %v159
    %v165 = vadd.f32 %v161, %v163
    %v166 = vadd.f32 %v162, %v164
    %v167 = vrsqrt.pop %v165
    %v168 = vmul.f32 %v165, %v167
    %vm169 = vcmp.eq.f32.partialorder %v165, inf
    %v170 = vsel %vm169, %v165, %v168
    %vm171 = vcmp.eq.f32.partialorder %v165, 0.0
    %v172 = vand.u32 %v165, 2147483648
    %v173 = vsel %vm171, %v172, %v170
    %v174 = vrsqrt.pop %v166
    %v175 = vmul.f32 %v166, %v174
    %vm176 = vcmp.eq.f32.partialorder %v166, inf
    %v177 = vsel %vm176, %v166, %v175
    %vm178 = vcmp.eq.f32.partialorder %v166, 0.0
    %v179 = vand.u32 %v166, 2147483648
    %v180 = vsel %vm178, %v179, %v177
    %v181 = vld [vmem:[%s2] sm:$0xf]
    %v182 = vld [vmem:[%s2 + $0x4] sm:$0xf]
    %v183 = vld [vmem:[%s2 + $0x8] sm:$0xf]
    %v184 = vld [vmem:[%s2 + $0xc] sm:$0xf]
    %v185 = vld [vmem:[%s2 + $0x10] sm:$0xf]
    %v186 = vld [vmem:[%s2 + $0x14] sm:$0xf]
    %v187 = vld [vmem:[%s2 + $0x18] sm:$0xf]
    %v188 = vld [vmem:[%s2 + $0x1c] sm:$0xf]
    %v189 = vld [vmem:[%s2 + $0x20] sm:$0xf]
    %v190 = vld [vmem:[%s2 + $0x24] sm:$0xf]
    %v191 = vld [vmem:[%s2 + $0x28] sm:$0xf]
    %v192 = vld [vmem:[%s2 + $0x2c] sm:$0xf]
    %v193 = vld [vmem:[%s2 + $0x30] sm:$0xf]
    %v194 = vld [vmem:[%s2 + $0x34] sm:$0xf]
    %v195 = vld [vmem:[%s2 + $0x38] sm:$0xf]
    %v196 = vld [vmem:[%s2 + $0x3c] sm:$0xf]
    %v197 = vpack.c.bf16 %v180, %v173
    %v214 = vunpack.c.l.b16 %v181
    %v215 = vunpack.c.l.b16 %v182
    %v216 = vunpack.c.l.b16 %v183
    %v217 = vunpack.c.l.b16 %v184
    %v218 = vunpack.c.l.b16 %v185
    %v219 = vunpack.c.l.b16 %v186
    %v220 = vunpack.c.l.b16 %v187
    %v221 = vunpack.c.l.b16 %v188
    %v222 = vunpack.c.l.b16 %v189
    %v223 = vunpack.c.l.b16 %v190
    %v224 = vunpack.c.l.b16 %v191
    %v225 = vunpack.c.l.b16 %v192
    %v226 = vunpack.c.l.b16 %v193
    %v227 = vunpack.c.l.b16 %v194
    %v228 = vunpack.c.l.b16 %v195
    %v229 = vunpack.c.l.b16 %v196
    %v230 = vpack.c.b16 %v215, %v214
    %v231 = vpack.c.b16 %v217, %v216
    %v232 = vpack.c.b16 %v219, %v218
    %v233 = vpack.c.b16 %v221, %v220
    %v234 = vpack.c.b16 %v223, %v222
    %v235 = vpack.c.b16 %v225, %v224
    %v236 = vpack.c.b16 %v227, %v226
    %v237 = vpack.c.b16 %v229, %v228
    %246 = vmatprep.subr.bf16.mxu0 0
    %247 = vmatpush1.bf16.msra.mxu0 %v237
    %248 = vmatprep.subr.bf16.mxu0 0
    %249 = vmatpush1.bf16.msra.mxu0 %v236
    %250 = vmatprep.subr.bf16.mxu0 0
    %251 = vmatpush1.bf16.msra.mxu0 %v235
    %252 = vmatprep.subr.bf16.mxu0 0
    %253 = vmatpush1.bf16.msra.mxu0 %v234
    %254 = vmatprep.subr.bf16.mxu0 0
    %255 = vmatpush1.bf16.msra.mxu0 %v233
    %256 = vmatprep.subr.bf16.mxu0 0
    %257 = vmatpush1.bf16.msra.mxu0 %v232
    %258 = vmatprep.subr.bf16.mxu0 0
    %259 = vmatpush1.bf16.msra.mxu0 %v231
    %260 = vmatprep.subr.bf16.mxu0 0
    %261 = vmatpush1.bf16.msra.mxu0 %v230
    %262 = vmatprep.subr.bf16.mxu0 0
    %263 = vmatpush2.bf16.msra.mxu0 0
    %264 = vmatprep.subr.bf16.mxu0 0
    %265 = vmatpush2.bf16.msra.mxu0 0
    %266 = vmatprep.subr.bf16.mxu0 0
    %267 = vmatpush2.bf16.msra.mxu0 0
    %268 = vmatprep.subr.bf16.mxu0 0
    %269 = vmatpush2.bf16.msra.mxu0 0
    %270 = vmatprep.subr.bf16.mxu0 0
    %271 = vmatpush2.bf16.msra.mxu0 0
    %272 = vmatprep.subr.bf16.mxu0 0
    %273 = vmatpush2.bf16.msra.mxu0 0
    %274 = vmatprep.subr.bf16.mxu0 0
    %275 = vmatpush2.bf16.msra.mxu0 0
    %276 = vmatprep.subr.bf16.mxu0 0
    %277 = vmatpush2.bf16.msra.mxu0 0
    %278 = vmatprep.mubr.bf16.mxu0 0
    %279 = vmatmul.mubr.bf16.gmra.mxu0 %v197
    %v280 = vpop.f32.mrf.mxu0
    %v281 = vadd.f32 0.0, %v280
    %v282 = vpop.f32.mrf.mxu0
    %v283 = vpop.f32.mrf.mxu0
    %v284 = vadd.f32 0.0, %v283
    %v285 = vpop.f32.mrf.mxu0
    %286 = vdwg.mxu0
    %vm287 = vcmp.gt.f32.partialorder %v281, 0.0
    %vm288 = vcmp.gt.f32.partialorder %v284, 0.0
    %v289 = vsel %vm287, %v281, 1.0
    %v290 = vsel %vm288, %v284, 1.0
    %v291 = vlog2.pop %v289
    %v292 = vmul.f32 %v291, 0.6931472
    %v293 = vlog2.pop %v290
    %v294 = vmul.f32 %v293, 0.6931472
    %v295 = vmul.f32 %v292, 0.6
    %v296 = vmul.f32 %v294, 0.6
    %v297 = vmul.f32 %v295, 1.442695
    %v298 = vpow.pop %v297
    %v299 = vmul.f32 %v296, 1.442695
    %v300 = vpow.pop %v299
    %v301 = vsel %vm287, %v298, 0.0
    %v302 = vsel %vm288, %v300, 0.0
    %s303 = scalar_lea.vmem %s2, 64
    %v304 = vld [vmem:[%s303] sm:$0xf]
    %v305 = vld [vmem:[%s303 + $0x4] sm:$0xf]
    %v306 = vld [vmem:[%s303 + $0x8] sm:$0xf]
    %v307 = vld [vmem:[%s303 + $0xc] sm:$0xf]
    %v308 = vld [vmem:[%s303 + $0x10] sm:$0xf]
    %v309 = vld [vmem:[%s303 + $0x14] sm:$0xf]
    %v310 = vld [vmem:[%s303 + $0x18] sm:$0xf]
    %v311 = vld [vmem:[%s303 + $0x1c] sm:$0xf]
    %v312 = vld [vmem:[%s303 + $0x20] sm:$0xf]
    %v313 = vld [vmem:[%s303 + $0x24] sm:$0xf]
    %v314 = vld [vmem:[%s303 + $0x28] sm:$0xf]
    %v315 = vld [vmem:[%s303 + $0x2c] sm:$0xf]
    %v316 = vld [vmem:[%s303 + $0x30] sm:$0xf]
    %v317 = vld [vmem:[%s303 + $0x34] sm:$0xf]
    %v318 = vld [vmem:[%s303 + $0x38] sm:$0xf]
    %v319 = vld [vmem:[%s303 + $0x3c] sm:$0xf]
    %v320 = vpack.c.bf16 %v302, %v301
    %v337 = vunpack.c.l.b16 %v304
    %v338 = vunpack.c.l.b16 %v305
    %v339 = vunpack.c.l.b16 %v306
    %v340 = vunpack.c.l.b16 %v307
    %v341 = vunpack.c.l.b16 %v308
    %v342 = vunpack.c.l.b16 %v309
    %v343 = vunpack.c.l.b16 %v310
    %v344 = vunpack.c.l.b16 %v311
    %v345 = vunpack.c.l.b16 %v312
    %v346 = vunpack.c.l.b16 %v313
    %v347 = vunpack.c.l.b16 %v314
    %v348 = vunpack.c.l.b16 %v315
    %v349 = vunpack.c.l.b16 %v316
    %v350 = vunpack.c.l.b16 %v317
    %v351 = vunpack.c.l.b16 %v318
    %v352 = vunpack.c.l.b16 %v319
    %v353 = vpack.c.b16 %v338, %v337
    %v354 = vpack.c.b16 %v340, %v339
    %v355 = vpack.c.b16 %v342, %v341
    %v356 = vpack.c.b16 %v344, %v343
    %v357 = vpack.c.b16 %v346, %v345
    %v358 = vpack.c.b16 %v348, %v347
    %v359 = vpack.c.b16 %v350, %v349
    %v360 = vpack.c.b16 %v352, %v351
    %369 = vmatprep.subr.bf16.mxu0 0
    %370 = vmatpush1.bf16.msra.mxu0 %v360
    %371 = vmatprep.subr.bf16.mxu0 0
    %372 = vmatpush1.bf16.msra.mxu0 %v359
    %373 = vmatprep.subr.bf16.mxu0 0
    %374 = vmatpush1.bf16.msra.mxu0 %v358
    %375 = vmatprep.subr.bf16.mxu0 0
    %376 = vmatpush1.bf16.msra.mxu0 %v357
    %377 = vmatprep.subr.bf16.mxu0 0
    %378 = vmatpush1.bf16.msra.mxu0 %v356
    %379 = vmatprep.subr.bf16.mxu0 0
    %380 = vmatpush1.bf16.msra.mxu0 %v355
    %381 = vmatprep.subr.bf16.mxu0 0
    %382 = vmatpush1.bf16.msra.mxu0 %v354
    %383 = vmatprep.subr.bf16.mxu0 0
    %384 = vmatpush1.bf16.msra.mxu0 %v353
    %385 = vmatprep.subr.bf16.mxu0 0
    %386 = vmatpush2.bf16.msra.mxu0 0
    %387 = vmatprep.subr.bf16.mxu0 0
    %388 = vmatpush2.bf16.msra.mxu0 0
    %389 = vmatprep.subr.bf16.mxu0 0
    %390 = vmatpush2.bf16.msra.mxu0 0
    %391 = vmatprep.subr.bf16.mxu0 0
    %392 = vmatpush2.bf16.msra.mxu0 0
    %393 = vmatprep.subr.bf16.mxu0 0
    %394 = vmatpush2.bf16.msra.mxu0 0
    %395 = vmatprep.subr.bf16.mxu0 0
    %396 = vmatpush2.bf16.msra.mxu0 0
    %397 = vmatprep.subr.bf16.mxu0 0
    %398 = vmatpush2.bf16.msra.mxu0 0
    %399 = vmatprep.subr.bf16.mxu0 0
    %400 = vmatpush2.bf16.msra.mxu0 0
    %401 = vmatprep.mubr.bf16.mxu0 0
    %402 = vmatmul.mubr.bf16.gmra.mxu0 %v320
    %v403 = vpop.f32.mrf.mxu0
    %v404 = vadd.f32 0.0, %v403
    %v405 = vpop.f32.mrf.mxu0
    %v406 = vpop.f32.mrf.mxu0
    %v407 = vadd.f32 0.0, %v406
    %v408 = vpop.f32.mrf.mxu0
    %409 = vdwg.mxu0
    %vm410 = vcmp.gt.f32.partialorder %v404, 0.0
    %vm411 = vcmp.gt.f32.partialorder %v407, 0.0
    %v412 = vsel %vm410, %v404, 1.0
    %v413 = vsel %vm411, %v407, 1.0
    %v414 = vlog2.pop %v412
    %v415 = vmul.f32 %v414, 0.6931472
    %v416 = vlog2.pop %v413
    %v417 = vmul.f32 %v416, 0.6931472
    %v418 = vmul.f32 %v415, 0.7
    %v419 = vmul.f32 %v417, 0.7
    %v420 = vmul.f32 %v418, 1.442695
    %v421 = vpow.pop %v420
    %v422 = vmul.f32 %v419, 1.442695
    %v423 = vpow.pop %v422
    %v424 = vsel %vm410, %v421, 0.0
    %v425 = vsel %vm411, %v423, 0.0
    %v426 = vpack.c.bf16 %v425, %v424
    %427 = vmatprep.subr.bf16.mxu0 0
    %428 = vmatpush1.bf16.msra.mxu0 %v237
    %429 = vmatprep.subr.bf16.mxu0 0
    %430 = vmatpush1.bf16.msra.mxu0 %v236
    %431 = vmatprep.subr.bf16.mxu0 0
    %432 = vmatpush1.bf16.msra.mxu0 %v235
    %433 = vmatprep.subr.bf16.mxu0 0
    %434 = vmatpush1.bf16.msra.mxu0 %v234
    %435 = vmatprep.subr.bf16.mxu0 0
    %436 = vmatpush1.bf16.msra.mxu0 %v233
    %437 = vmatprep.subr.bf16.mxu0 0
    %438 = vmatpush1.bf16.msra.mxu0 %v232
    %439 = vmatprep.subr.bf16.mxu0 0
    %440 = vmatpush1.bf16.msra.mxu0 %v231
    %441 = vmatprep.subr.bf16.mxu0 0
    %442 = vmatpush1.bf16.msra.mxu0 %v230
    %443 = vmatprep.subr.bf16.mxu0 0
    %444 = vmatpush2.bf16.msra.mxu0 0
    %445 = vmatprep.subr.bf16.mxu0 0
    %446 = vmatpush2.bf16.msra.mxu0 0
    %447 = vmatprep.subr.bf16.mxu0 0
    %448 = vmatpush2.bf16.msra.mxu0 0
    %449 = vmatprep.subr.bf16.mxu0 0
    %450 = vmatpush2.bf16.msra.mxu0 0
    %451 = vmatprep.subr.bf16.mxu0 0
    %452 = vmatpush2.bf16.msra.mxu0 0
    %453 = vmatprep.subr.bf16.mxu0 0
    %454 = vmatpush2.bf16.msra.mxu0 0
    %455 = vmatprep.subr.bf16.mxu0 0
    %456 = vmatpush2.bf16.msra.mxu0 0
    %457 = vmatprep.subr.bf16.mxu0 0
    %458 = vmatpush2.bf16.msra.mxu0 0
    %459 = vmatprep.mubr.bf16.mxu0 0
    %460 = vmatmul.mubr.bf16.gmra.mxu0 %v426
    %v461 = vpop.f32.mrf.mxu0
    %v462 = vadd.f32 0.0, %v461
    %v463 = vpop.f32.mrf.mxu0
    %v464 = vpop.f32.mrf.mxu0
    %v465 = vadd.f32 0.0, %v464
    %v466 = vpop.f32.mrf.mxu0
    %467 = vdwg.mxu0
    %vm468 = vcmp.gt.f32.partialorder %v462, 0.0
    %vm469 = vcmp.gt.f32.partialorder %v465, 0.0
    %v470 = vsel %vm468, %v462, 1.0
    %v471 = vsel %vm469, %v465, 1.0
    %v472 = vlog2.pop %v470
    %v473 = vmul.f32 %v472, 0.6931472
    %v474 = vlog2.pop %v471
    %v475 = vmul.f32 %v474, 0.6931472
    %v476 = vmul.f32 %v473, 0.8
    %v477 = vmul.f32 %v475, 0.8
    %v478 = vmul.f32 %v476, 1.442695
    %v479 = vpow.pop %v478
    %v480 = vmul.f32 %v477, 1.442695
    %v481 = vpow.pop %v480
    %v482 = vsel %vm468, %v479, 0.0
    %v483 = vsel %vm469, %v481, 0.0
    %484 = vst [vmem:[#allocation2] sm:$0xff] %v482
    %485 = vst [vmem:[#allocation2 + $0x8] sm:$0xff] %v483
    %486 = vst [vmem:[#allocation4] sm:$0xff] %v424
    %487 = vst [vmem:[#allocation4 + $0x8] sm:$0xff] %v425
    // Predicated region
    $region14: #{mlc_forward.1} parent=1 // pred_check
      _
    $region15: #{mlc_forward.1} parent=1 // pred_check_branch
      %489 = sbr.rel (0) target = $region17
    $region16: #{mlc_forward.1} parent=1 // pred_region
      %s491 = ssub.s32 256, 256
      %492 = vsyncadd [#allocation3], %s491
      %s493 = sshll.u32 [#allocation2], 4
      %s494 = int_to_ptr.vmem [resolvable:$true] %s493
      %499 = dma.vmem_to_hbm [thread:$0]  %s494, 256, %s3, [#allocation3], 128, 128, 8
    $region17: #{mlc_forward.1} parent=1 // pred_fallthru
      _
    // Predicated region
    $region18: #{mlc_forward.1} parent=1 // pred_check
      _
    $region19: #{mlc_forward.1} parent=1 // pred_check_branch
      %501 = sbr.rel (0) target = $region21
    $region20: #{mlc_forward.1} parent=1 // pred_region
      %s503 = ssub.s32 256, 256
      %504 = vsyncadd [#allocation5], %s503
      %s505 = sshll.u32 [#allocation4], 4
      %s506 = int_to_ptr.vmem [resolvable:$true] %s505
      %511 = dma.vmem_to_hbm [thread:$0]  %s506, 256, %s4, [#allocation5], 128, 128, 8
    $region21: #{mlc_forward.1} parent=1 // pred_fallthru
      _
    // Predicated region
    $region22: #{mlc_forward.1} parent=1 // pred_check
      _
    $region23: #{mlc_forward.1} parent=1 // pred_check_branch
      %513 = sbr.rel (0) target = $region25
    $region24: #{mlc_forward.1} parent=1 // pred_region
      %514 = dma.done [#allocation3], 256
    $region25: #{mlc_forward.1} parent=1 // pred_fallthru
      _
    // Predicated region
    $region26: #{mlc_forward.1} parent=1 // pred_check
      _
    $region27: #{mlc_forward.1} parent=1 // pred_check_branch
      %516 = sbr.rel (0) target = $region29
    $region28: #{mlc_forward.1} parent=1 // pred_region
      %517 = dma.done [#allocation5], 256
    $region29: #{mlc_forward.1} parent=1 // pred_fallthru
      _
    %518 = vsyncpa [#allocation3], 1
    %519 = vsyncpa [#allocation5], 1

</llo_original>
